<compile_context>
chip_gen: v6e
topology: v6e:2x2x1
jax: 0.10.0
libtpu: 0.0.40
codegen_flags: <defaults>
</compile_context>

<pallas_src>
from functools import partial

import numpy as np
import jax
import jax.numpy as jnp
from jax import lax
from jax.experimental import pallas as pl
from jax.experimental.pallas import tpu as pltpu

LANE = 128
MIN_GRID_STEPS = 2        # keep >=2 blocks so v7x's two TensorCores both get work
MAX_UNROLL_T = 16         # Python-unroll the time loop up to this T, fori_loop beyond
VMEM_SLACK_BYTES = 8 << 20


def _block_bytes_target():
    """~8 MiB input blocks on 128 MiB-VMEM parts (v5e/v6e), ~4 MiB on v7x (64 MiB)."""
    try:
        vmem = pltpu.get_tpu_info().vmem_capacity_bytes
    except Exception:
        vmem = 64 << 20   # conservative default if the query is unavailable
    return (8 << 20) if vmem >= (100 << 20) else (4 << 20)


def _lif_kernel(x_ref, o_ref, *, T, thresh, tau, unroll):
    """LIF recurrence over the time axis on one (T, tm, 128) tile.

    x_ref: (T, tm, 128) input tile (any float dtype, cast to f32 per element).
    o_ref: (T, tm, 128) spike tile (0/1 values in o_ref.dtype).
    """
    thresh = jnp.float32(thresh)
    tau = jnp.float32(tau)

    def step(t, mem):
        mem = mem * tau + x_ref[t].astype(jnp.float32)
        fired = (mem - thresh) >= 0.0           # exact ZIF forward compare
        o_ref[t] = fired.astype(o_ref.dtype)    # spike = 1 where fired
        return jnp.where(fired, 0.0, mem)       # reset-to-zero

    mem0 = jnp.zeros(x_ref.shape[1:], dtype=jnp.float32)
    if unroll:
        mem = mem0
        for t in range(T):                      # small static T -> unrolled
            mem = step(t, mem)
    else:
        lax.fori_loop(0, T, step, mem0)         # large T: bound live ranges / code size
    # NOTE(perf, secondary): if narrower dtypes ever make this VMEM-store-slot
    # bound (v5e has a single vst slot), chunk the tm axis with an inner
    # fori_loop and carry `mem` per-chunk so it stays register-resident between
    # timesteps instead of round-tripping VMEM.


def lif_spike(x, T, thresh=1.0, tau=0.99, gama=1.0, out_dtype=jnp.bfloat16):
    """Pallas implementation of LIFSpike.forward.

    x: (T*B, ...) activations -> (T*B, ...) spikes (0/1 values) in `out_dtype`.
    bf16 output is bit-exact for {0,1} and halves output HBM traffic; pass
    out_dtype=jnp.float32 to reproduce the PyTorch `.float()` output dtype.
    Input dtype is passed through unchanged (bf16 inputs halve read traffic).
    """
    del gama  # only used by the ZIF surrogate gradient (backward); forward ignores it
    TB = x.shape[0]
    assert TB % T == 0, "leading dim must be T*B"
    feat_shape = x.shape[1:]
    N = (TB // T) * int(np.prod(feat_shape))

    # Expand temporal dim + flatten features (pure metadata reshape, no copy).
    x2 = x.reshape(T, N)

    # Lane padding only when B*C*H*W is not a multiple of 128 (rare for conv
    # activations; typically only tiny FC/classifier tensors hit it).
    # TODO(synk): the pad + output slice cost ~2 extra HBM passes; replace this
    # ragged fallback with an in-kernel masked tail if ragged shapes ever show
    # up on large tensors.
    pad = (-N) % LANE
    if pad:
        x2 = jnp.pad(x2, ((0, 0), (0, pad)))
    Np = N + pad
    M = Np // LANE
    x3 = x2.reshape(T, M, LANE)

    in_dt = jnp.dtype(x3.dtype)
    out_dt = jnp.dtype(out_dtype)
    # Sublane alignment for the tiled M axis: 8 rows for 32-bit, 16 for 16-bit,
    # 32 for 8-bit dtypes (packed-sublane layouts), across input AND output.
    align = max(8 * (4 // in_dt.itemsize), 8 * (4 // out_dt.itemsize))

    if M <= align:
        tm = M                        # full extent is always a legal block dim
    else:
        blk_bytes = _block_bytes_target()
        tm = max(align, (blk_bytes // (T * LANE * in_dt.itemsize)) // align * align)
        tm = min(tm, (M // align) * align)
        # v7x shards the "parallel" grid axis across its 2 TensorCores: make
        # sure the grid has >= MIN_GRID_STEPS blocks whenever M can be split.
        if M >= MIN_GRID_STEPS * align:
            tm = min(tm, max(align, (M // MIN_GRID_STEPS) // align * align))
    # TODO(synk): for very large T the tm formula hits the `align` floor; tile T
    # onto an 'arbitrary' grid axis with `mem` carried in VMEM scratch instead.
    grid = (pl.cdiv(M, tm),)

    # VMEM budget from the actual footprint: double-buffered input and output
    # blocks plus a few f32 (tm, 128) temporaries for the unrolled chain.
    in_blk = T * tm * LANE * in_dt.itemsize
    out_blk = T * tm * LANE * out_dt.itemsize
    vmem_limit = min(2 * (in_blk + out_blk) + 6 * tm * LANE * 4 + VMEM_SLACK_BYTES,
                     128 << 20)

    out = pl.pallas_call(
        partial(_lif_kernel, T=T, thresh=float(thresh), tau=float(tau),
                unroll=(T <= MAX_UNROLL_T)),
        out_shape=jax.ShapeDtypeStruct((T, M, LANE), out_dt),
        grid=grid,
        in_specs=[pl.BlockSpec((T, tm, LANE), lambda i: (0, i, 0))],
        out_specs=pl.BlockSpec((T, tm, LANE), lambda i: (0, i, 0)),
        compiler_params=pltpu.CompilerParams(
            dimension_semantics=("parallel",),   # megacore-shardable grid
            vmem_limit_bytes=int(vmem_limit),
        ),
    )(x3)

    # Merge temporal dim back: (T, M, 128) -> (T*B, ...).
    out2 = out.reshape(T, Np)
    if pad:
        out2 = out2[:, :N]
    return out2.reshape((TB,) + feat_shape)


def _lif_reference(x, T, thresh=1.0, tau=0.99):
    """Pure-JAX reference mirroring the PyTorch loop exactly (f32 math)."""
    TB = x.shape[0]
    B = TB // T
    xe = x.reshape((T, B) + x.shape[1:]).astype(jnp.float32)
    mem = jnp.zeros_like(xe[0])
    spikes = []
    for t in range(T):
        mem = mem * jnp.float32(tau) + xe[t]
        spike = ((mem - jnp.float32(thresh)) >= 0).astype(jnp.float32)
        mem = (1.0 - spike) * mem
        spikes.append(spike)
    return jnp.stack(spikes, 0).reshape((TB,) + x.shape[1:])


if __name__ == "__main__":
    # LIFSpike(T=8) applied to an NCHW activation stream of shape (T*B, C, H, W).
    T, B, C, H, W = 8, 2, 4, 16, 16
    key = jax.random.PRNGKey(0)
    x = jax.random.normal(key, (T * B, C, H, W), dtype=jnp.float32) * 1.5

    # Default fast path: f32 input, bf16 spikes (exact 0/1 values).
    out = lif_spike(x, T=T, thresh=1.0, tau=0.99, gama=1.0)
    out = jax.block_until_ready(out)
    assert out.shape == x.shape and out.dtype == jnp.bfloat16
    ref = _lif_reference(x, T=T, thresh=1.0, tau=0.99)
    np.testing.assert_array_equal(np.asarray(out.astype(jnp.float32)), np.asarray(ref))

    # Secondary check: bf16 input pass-through, f32 output (exact PyTorch dtype),
    # ragged feature count (exercises the padded fallback path).
    x_b = (jax.random.normal(jax.random.PRNGKey(1), (T * B, 4, 3, 5)) * 1.5).astype(jnp.bfloat16)
    out_b = jax.block_until_ready(lif_spike(x_b, T=T, out_dtype=jnp.float32))
    assert out_b.shape == x_b.shape and out_b.dtype == jnp.float32
    ref_b = _lif_reference(x_b, T=T)
    np.testing.assert_array_equal(np.asarray(out_b), np.asarray(ref_b))

    print("KERNEL_OK")
</pallas_src>

<mosaic_0001>
module attributes {stable_mosaic.version = 11 : i64} {
  func.func @_lif_kernel(%arg0: i32, %arg1: memref<8x16x128xf32, #tpu.memory_space<vmem>>, %arg2: memref<8x16x128xbf16, #tpu.memory_space<vmem>>) attributes {dimension_semantics = [#tpu.dimension_semantics<parallel>], iteration_bounds = array<i64: 1>, scalar_prefetch = 0 : i64, scratch_operands = 0 : i64, tpu.core_type = #tpu.core_type<tc>, window_params = [{transform_indices = @transform_0, window_bounds = array<i64: 8, 16, 128>}, {transform_indices = @transform_1, window_bounds = array<i64: 8, 16, 128>}]} {
    %cst = arith.constant 0.000000e+00 : f32
    %0 = vector.broadcast %cst : f32 to vector<16x128xf32>
    %cst_0 = arith.constant 9.900000e-01 : f32
    %1 = vector.broadcast %cst_0 : f32 to vector<16x128xf32>
    %2 = arith.mulf %0, %1 : vector<16x128xf32>
    %c0 = arith.constant 0 : index
    %c0_1 = arith.constant 0 : index
    %c0_2 = arith.constant 0 : index
    %3 = vector.load %arg1[%c0, %c0_1, %c0_2] : memref<8x16x128xf32, #tpu.memory_space<vmem>>, vector<1x16x128xf32>
    %4 = vector.shape_cast %3 : vector<1x16x128xf32> to vector<16x128xf32>
    %5 = arith.addf %2, %4 : vector<16x128xf32>
    %cst_3 = arith.constant 1.000000e+00 : f32
    %6 = vector.broadcast %cst_3 : f32 to vector<16x128xf32>
    %7 = arith.subf %5, %6 : vector<16x128xf32>
    %cst_4 = arith.constant 0.000000e+00 : f32
    %8 = vector.broadcast %cst_4 : f32 to vector<16x128xf32>
    %9 = arith.cmpf oge, %7, %8 : vector<16x128xf32>
    %10 = arith.extui %9 : vector<16x128xi1> to vector<16x128xi32>
    %11 = arith.sitofp %10 : vector<16x128xi32> to vector<16x128xf32>
    %12 = arith.truncf %11 : vector<16x128xf32> to vector<16x128xbf16>
    %c0_5 = arith.constant 0 : index
    %c0_6 = arith.constant 0 : index
    %c0_7 = arith.constant 0 : index
    %13 = vector.load %arg2[%c0_5, %c0_6, %c0_7] : memref<8x16x128xbf16, #tpu.memory_space<vmem>>, vector<1x16x128xbf16>
    %14 = vector.shape_cast %13 : vector<1x16x128xbf16> to vector<16x128xbf16>
    %15 = vector.shape_cast %12 : vector<16x128xbf16> to vector<1x16x128xbf16>
    tpu.vector_store %arg2[%c0_5, %c0_6, %c0_7], %15 {strides = array<i32>} : memref<8x16x128xbf16, #tpu.memory_space<vmem>>, vector<1x16x128xbf16>,
    %cst_8 = arith.constant 0.000000e+00 : f32
    %16 = vector.broadcast %cst_8 : f32 to vector<16x128xf32>
    %17 = arith.select %9, %16, %5 : vector<16x128xi1>, vector<16x128xf32>
    %cst_9 = arith.constant 9.900000e-01 : f32
    %18 = vector.broadcast %cst_9 : f32 to vector<16x128xf32>
    %19 = arith.mulf %17, %18 : vector<16x128xf32>
    %c1 = arith.constant 1 : index
    %c0_10 = arith.constant 0 : index
    %c0_11 = arith.constant 0 : index
    %20 = vector.load %arg1[%c1, %c0_10, %c0_11] : memref<8x16x128xf32, #tpu.memory_space<vmem>>, vector<1x16x128xf32>
    %21 = vector.shape_cast %20 : vector<1x16x128xf32> to vector<16x128xf32>
    %22 = arith.addf %19, %21 : vector<16x128xf32>
    %cst_12 = arith.constant 1.000000e+00 : f32
    %23 = vector.broadcast %cst_12 : f32 to vector<16x128xf32>
    %24 = arith.subf %22, %23 : vector<16x128xf32>
    %cst_13 = arith.constant 0.000000e+00 : f32
    %25 = vector.broadcast %cst_13 : f32 to vector<16x128xf32>
    %26 = arith.cmpf oge, %24, %25 : vector<16x128xf32>
    %27 = arith.extui %26 : vector<16x128xi1> to vector<16x128xi32>
    %28 = arith.sitofp %27 : vector<16x128xi32> to vector<16x128xf32>
    %29 = arith.truncf %28 : vector<16x128xf32> to vector<16x128xbf16>
    %c1_14 = arith.constant 1 : index
    %c0_15 = arith.constant 0 : index
    %c0_16 = arith.constant 0 : index
    %30 = vector.load %arg2[%c1_14, %c0_15, %c0_16] : memref<8x16x128xbf16, #tpu.memory_space<vmem>>, vector<1x16x128xbf16>
    %31 = vector.shape_cast %30 : vector<1x16x128xbf16> to vector<16x128xbf16>
    %32 = vector.shape_cast %29 : vector<16x128xbf16> to vector<1x16x128xbf16>
    tpu.vector_store %arg2[%c1_14, %c0_15, %c0_16], %32 {strides = array<i32>} : memref<8x16x128xbf16, #tpu.memory_space<vmem>>, vector<1x16x128xbf16>,
    %cst_17 = arith.constant 0.000000e+00 : f32
    %33 = vector.broadcast %cst_17 : f32 to vector<16x128xf32>
    %34 = arith.select %26, %33, %22 : vector<16x128xi1>, vector<16x128xf32>
    %cst_18 = arith.constant 9.900000e-01 : f32
    %35 = vector.broadcast %cst_18 : f32 to vector<16x128xf32>
    %36 = arith.mulf %34, %35 : vector<16x128xf32>
    %c2 = arith.constant 2 : index
    %c0_19 = arith.constant 0 : index
    %c0_20 = arith.constant 0 : index
    %37 = vector.load %arg1[%c2, %c0_19, %c0_20] : memref<8x16x128xf32, #tpu.memory_space<vmem>>, vector<1x16x128xf32>
    %38 = vector.shape_cast %37 : vector<1x16x128xf32> to vector<16x128xf32>
    %39 = arith.addf %36, %38 : vector<16x128xf32>
    %cst_21 = arith.constant 1.000000e+00 : f32
    %40 = vector.broadcast %cst_21 : f32 to vector<16x128xf32>
    %41 = arith.subf %39, %40 : vector<16x128xf32>
    %cst_22 = arith.constant 0.000000e+00 : f32
    %42 = vector.broadcast %cst_22 : f32 to vector<16x128xf32>
    %43 = arith.cmpf oge, %41, %42 : vector<16x128xf32>
    %44 = arith.extui %43 : vector<16x128xi1> to vector<16x128xi32>
    %45 = arith.sitofp %44 : vector<16x128xi32> to vector<16x128xf32>
    %46 = arith.truncf %45 : vector<16x128xf32> to vector<16x128xbf16>
    %c2_23 = arith.constant 2 : index
    %c0_24 = arith.constant 0 : index
    %c0_25 = arith.constant 0 : index
    %47 = vector.load %arg2[%c2_23, %c0_24, %c0_25] : memref<8x16x128xbf16, #tpu.memory_space<vmem>>, vector<1x16x128xbf16>
    %48 = vector.shape_cast %47 : vector<1x16x128xbf16> to vector<16x128xbf16>
    %49 = vector.shape_cast %46 : vector<16x128xbf16> to vector<1x16x128xbf16>
    tpu.vector_store %arg2[%c2_23, %c0_24, %c0_25], %49 {strides = array<i32>} : memref<8x16x128xbf16, #tpu.memory_space<vmem>>, vector<1x16x128xbf16>,
    %cst_26 = arith.constant 0.000000e+00 : f32
    %50 = vector.broadcast %cst_26 : f32 to vector<16x128xf32>
    %51 = arith.select %43, %50, %39 : vector<16x128xi1>, vector<16x128xf32>
    %cst_27 = arith.constant 9.900000e-01 : f32
    %52 = vector.broadcast %cst_27 : f32 to vector<16x128xf32>
    %53 = arith.mulf %51, %52 : vector<16x128xf32>
    %c3 = arith.constant 3 : index
    %c0_28 = arith.constant 0 : index
    %c0_29 = arith.constant 0 : index
    %54 = vector.load %arg1[%c3, %c0_28, %c0_29] : memref<8x16x128xf32, #tpu.memory_space<vmem>>, vector<1x16x128xf32>
    %55 = vector.shape_cast %54 : vector<1x16x128xf32> to vector<16x128xf32>
    %56 = arith.addf %53, %55 : vector<16x128xf32>
    %cst_30 = arith.constant 1.000000e+00 : f32
    %57 = vector.broadcast %cst_30 : f32 to vector<16x128xf32>
    %58 = arith.subf %56, %57 : vector<16x128xf32>
    %cst_31 = arith.constant 0.000000e+00 : f32
    %59 = vector.broadcast %cst_31 : f32 to vector<16x128xf32>
    %60 = arith.cmpf oge, %58, %59 : vector<16x128xf32>
    %61 = arith.extui %60 : vector<16x128xi1> to vector<16x128xi32>
    %62 = arith.sitofp %61 : vector<16x128xi32> to vector<16x128xf32>
    %63 = arith.truncf %62 : vector<16x128xf32> to vector<16x128xbf16>
    %c3_32 = arith.constant 3 : index
    %c0_33 = arith.constant 0 : index
    %c0_34 = arith.constant 0 : index
    %64 = vector.load %arg2[%c3_32, %c0_33, %c0_34] : memref<8x16x128xbf16, #tpu.memory_space<vmem>>, vector<1x16x128xbf16>
    %65 = vector.shape_cast %64 : vector<1x16x128xbf16> to vector<16x128xbf16>
    %66 = vector.shape_cast %63 : vector<16x128xbf16> to vector<1x16x128xbf16>
    tpu.vector_store %arg2[%c3_32, %c0_33, %c0_34], %66 {strides = array<i32>} : memref<8x16x128xbf16, #tpu.memory_space<vmem>>, vector<1x16x128xbf16>,
    %cst_35 = arith.constant 0.000000e+00 : f32
    %67 = vector.broadcast %cst_35 : f32 to vector<16x128xf32>
    %68 = arith.select %60, %67, %56 : vector<16x128xi1>, vector<16x128xf32>
    %cst_36 = arith.constant 9.900000e-01 : f32
    %69 = vector.broadcast %cst_36 : f32 to vector<16x128xf32>
    %70 = arith.mulf %68, %69 : vector<16x128xf32>
    %c4 = arith.constant 4 : index
    %c0_37 = arith.constant 0 : index
    %c0_38 = arith.constant 0 : index
    %71 = vector.load %arg1[%c4, %c0_37, %c0_38] : memref<8x16x128xf32, #tpu.memory_space<vmem>>, vector<1x16x128xf32>
    %72 = vector.shape_cast %71 : vector<1x16x128xf32> to vector<16x128xf32>
    %73 = arith.addf %70, %72 : vector<16x128xf32>
    %cst_39 = arith.constant 1.000000e+00 : f32
    %74 = vector.broadcast %cst_39 : f32 to vector<16x128xf32>
    %75 = arith.subf %73, %74 : vector<16x128xf32>
    %cst_40 = arith.constant 0.000000e+00 : f32
    %76 = vector.broadcast %cst_40 : f32 to vector<16x128xf32>
    %77 = arith.cmpf oge, %75, %76 : vector<16x128xf32>
    %78 = arith.extui %77 : vector<16x128xi1> to vector<16x128xi32>
    %79 = arith.sitofp %78 : vector<16x128xi32> to vector<16x128xf32>
    %80 = arith.truncf %79 : vector<16x128xf32> to vector<16x128xbf16>
    %c4_41 = arith.constant 4 : index
    %c0_42 = arith.constant 0 : index
    %c0_43 = arith.constant 0 : index
    %81 = vector.load %arg2[%c4_41, %c0_42, %c0_43] : memref<8x16x128xbf16, #tpu.memory_space<vmem>>, vector<1x16x128xbf16>
    %82 = vector.shape_cast %81 : vector<1x16x128xbf16> to vector<16x128xbf16>
    %83 = vector.shape_cast %80 : vector<16x128xbf16> to vector<1x16x128xbf16>
    tpu.vector_store %arg2[%c4_41, %c0_42, %c0_43], %83 {strides = array<i32>} : memref<8x16x128xbf16, #tpu.memory_space<vmem>>, vector<1x16x128xbf16>,
    %cst_44 = arith.constant 0.000000e+00 : f32
    %84 = vector.broadcast %cst_44 : f32 to vector<16x128xf32>
    %85 = arith.select %77, %84, %73 : vector<16x128xi1>, vector<16x128xf32>
    %cst_45 = arith.constant 9.900000e-01 : f32
    %86 = vector.broadcast %cst_45 : f32 to vector<16x128xf32>
    %87 = arith.mulf %85, %86 : vector<16x128xf32>
    %c5 = arith.constant 5 : index
    %c0_46 = arith.constant 0 : index
    %c0_47 = arith.constant 0 : index
    %88 = vector.load %arg1[%c5, %c0_46, %c0_47] : memref<8x16x128xf32, #tpu.memory_space<vmem>>, vector<1x16x128xf32>
    %89 = vector.shape_cast %88 : vector<1x16x128xf32> to vector<16x128xf32>
    %90 = arith.addf %87, %89 : vector<16x128xf32>
    %cst_48 = arith.constant 1.000000e+00 : f32
    %91 = vector.broadcast %cst_48 : f32 to vector<16x128xf32>
    %92 = arith.subf %90, %91 : vector<16x128xf32>
    %cst_49 = arith.constant 0.000000e+00 : f32
    %93 = vector.broadcast %cst_49 : f32 to vector<16x128xf32>
    %94 = arith.cmpf oge, %92, %93 : vector<16x128xf32>
    %95 = arith.extui %94 : vector<16x128xi1> to vector<16x128xi32>
    %96 = arith.sitofp %95 : vector<16x128xi32> to vector<16x128xf32>
    %97 = arith.truncf %96 : vector<16x128xf32> to vector<16x128xbf16>
    %c5_50 = arith.constant 5 : index
    %c0_51 = arith.constant 0 : index
    %c0_52 = arith.constant 0 : index
    %98 = vector.load %arg2[%c5_50, %c0_51, %c0_52] : memref<8x16x128xbf16, #tpu.memory_space<vmem>>, vector<1x16x128xbf16>
    %99 = vector.shape_cast %98 : vector<1x16x128xbf16> to vector<16x128xbf16>
    %100 = vector.shape_cast %97 : vector<16x128xbf16> to vector<1x16x128xbf16>
    tpu.vector_store %arg2[%c5_50, %c0_51, %c0_52], %100 {strides = array<i32>} : memref<8x16x128xbf16, #tpu.memory_space<vmem>>, vector<1x16x128xbf16>,
    %cst_53 = arith.constant 0.000000e+00 : f32
    %101 = vector.broadcast %cst_53 : f32 to vector<16x128xf32>
    %102 = arith.select %94, %101, %90 : vector<16x128xi1>, vector<16x128xf32>
    %cst_54 = arith.constant 9.900000e-01 : f32
    %103 = vector.broadcast %cst_54 : f32 to vector<16x128xf32>
    %104 = arith.mulf %102, %103 : vector<16x128xf32>
    %c6 = arith.constant 6 : index
    %c0_55 = arith.constant 0 : index
    %c0_56 = arith.constant 0 : index
    %105 = vector.load %arg1[%c6, %c0_55, %c0_56] : memref<8x16x128xf32, #tpu.memory_space<vmem>>, vector<1x16x128xf32>
    %106 = vector.shape_cast %105 : vector<1x16x128xf32> to vector<16x128xf32>
    %107 = arith.addf %104, %106 : vector<16x128xf32>
    %cst_57 = arith.constant 1.000000e+00 : f32
    %108 = vector.broadcast %cst_57 : f32 to vector<16x128xf32>
    %109 = arith.subf %107, %108 : vector<16x128xf32>
    %cst_58 = arith.constant 0.000000e+00 : f32
    %110 = vector.broadcast %cst_58 : f32 to vector<16x128xf32>
    %111 = arith.cmpf oge, %109, %110 : vector<16x128xf32>
    %112 = arith.extui %111 : vector<16x128xi1> to vector<16x128xi32>
    %113 = arith.sitofp %112 : vector<16x128xi32> to vector<16x128xf32>
    %114 = arith.truncf %113 : vector<16x128xf32> to vector<16x128xbf16>
    %c6_59 = arith.constant 6 : index
    %c0_60 = arith.constant 0 : index
    %c0_61 = arith.constant 0 : index
    %115 = vector.load %arg2[%c6_59, %c0_60, %c0_61] : memref<8x16x128xbf16, #tpu.memory_space<vmem>>, vector<1x16x128xbf16>
    %116 = vector.shape_cast %115 : vector<1x16x128xbf16> to vector<16x128xbf16>
    %117 = vector.shape_cast %114 : vector<16x128xbf16> to vector<1x16x128xbf16>
    tpu.vector_store %arg2[%c6_59, %c0_60, %c0_61], %117 {strides = array<i32>} : memref<8x16x128xbf16, #tpu.memory_space<vmem>>, vector<1x16x128xbf16>,
    %cst_62 = arith.constant 0.000000e+00 : f32
    %118 = vector.broadcast %cst_62 : f32 to vector<16x128xf32>
    %119 = arith.select %111, %118, %107 : vector<16x128xi1>, vector<16x128xf32>
    %cst_63 = arith.constant 9.900000e-01 : f32
    %120 = vector.broadcast %cst_63 : f32 to vector<16x128xf32>
    %121 = arith.mulf %119, %120 : vector<16x128xf32>
    %c7 = arith.constant 7 : index
    %c0_64 = arith.constant 0 : index
    %c0_65 = arith.constant 0 : index
    %122 = vector.load %arg1[%c7, %c0_64, %c0_65] : memref<8x16x128xf32, #tpu.memory_space<vmem>>, vector<1x16x128xf32>
    %123 = vector.shape_cast %122 : vector<1x16x128xf32> to vector<16x128xf32>
    %124 = arith.addf %121, %123 : vector<16x128xf32>
    %cst_66 = arith.constant 1.000000e+00 : f32
    %125 = vector.broadcast %cst_66 : f32 to vector<16x128xf32>
    %126 = arith.subf %124, %125 : vector<16x128xf32>
    %cst_67 = arith.constant 0.000000e+00 : f32
    %127 = vector.broadcast %cst_67 : f32 to vector<16x128xf32>
    %128 = arith.cmpf oge, %126, %127 : vector<16x128xf32>
    %129 = arith.extui %128 : vector<16x128xi1> to vector<16x128xi32>
    %130 = arith.sitofp %129 : vector<16x128xi32> to vector<16x128xf32>
    %131 = arith.truncf %130 : vector<16x128xf32> to vector<16x128xbf16>
    %c7_68 = arith.constant 7 : index
    %c0_69 = arith.constant 0 : index
    %c0_70 = arith.constant 0 : index
    %132 = vector.load %arg2[%c7_68, %c0_69, %c0_70] : memref<8x16x128xbf16, #tpu.memory_space<vmem>>, vector<1x16x128xbf16>
    %133 = vector.shape_cast %132 : vector<1x16x128xbf16> to vector<16x128xbf16>
    %134 = vector.shape_cast %131 : vector<16x128xbf16> to vector<1x16x128xbf16>
    tpu.vector_store %arg2[%c7_68, %c0_69, %c0_70], %134 {strides = array<i32>} : memref<8x16x128xbf16, #tpu.memory_space<vmem>>, vector<1x16x128xbf16>,
    return
  }
  func.func @transform_0(%arg0: i32) -> (i32, i32, i32) {
    %c0_i32 = arith.constant 0 : i32
    %c0_i32_0 = arith.constant 0 : i32
    %c0_i32_1 = arith.constant 0 : i32
    return %c0_i32, %arg0, %c0_i32_0 : i32, i32, i32
  }
  func.func @transform_1(%arg0: i32) -> (i32, i32, i32) {
    %c0_i32 = arith.constant 0 : i32
    %c0_i32_0 = arith.constant 0 : i32
    %c0_i32_1 = arith.constant 0 : i32
    return %c0_i32, %arg0, %c0_i32_0 : i32, i32, i32
  }
}

</mosaic_0001>

<llo_original>
// kernel: tpu_custom_call.1
$region0: #{tpu_custom_call.1}
  #allocation0 [shape = 'u32[]', space=smem, size = 0x4, offset = 0x4, fixed_abs, tag = 'smem constant byte address 0x4 - core index']
  #allocation1 [shape = 'u32[144,128]{1,0:T(1,128)}', space=vmem, size = 0x12000, scoped, tag = 'internal scratch']
  %s0 = inlined_call_operand.hbm [shape: f32[8,16,128], index: 0, kind: input, shape index: {}]
  %s1 = inlined_call_operand.hbm [shape: bf16[8,16,128], index: 1, kind: output, shape index: {}]
  %s2 = sld [smem:[#allocation0]]
  $region18: #{tpu_custom_call.1} parent=0
    _
  %s4 = ssub.s32 1, %s2
  %s5 = scalar_select 0, %s4, %s2
  $region1: #{tpu_custom_call.1} parent=0
    #allocation2 [shape = 'u8[65536]{0}', space=vmem, size = 0x10000, scoped, tag = 'input window, operand 0, single buffered']
    #allocation3 [shape = 's32[1]{0}', space=sflag, size = 0x4, scoped, tag = 'scoped memory for tpu_custom_call.1']
    #allocation4 [shape = 's32[1]{0}', space=sflag, size = 0x4, scoped, tag = 'scoped memory for tpu_custom_call.1']
    #allocation5 [shape = 'u8[32768]{0}', space=vmem, size = 0x8000, scoped, tag = 'output window, operand 0, single buffered']
    %6 = vsyncpa [#allocation3], 0
    %7 = vsyncpa [#allocation4], 0
    // Predicated region
    $region2: #{tpu_custom_call.1} parent=1 // pred_check
      _
    $region3: #{tpu_custom_call.1} parent=1 // pred_check_branch
      %9 = sbr.rel (0) target = $region5
    $region4: #{tpu_custom_call.1} parent=1 // pred_region
      %s11 = ssub.s32 2048, 2048
      %12 = vsyncadd [#allocation3], %s11
      %s13 = sshll.u32 [#allocation2], 4
      %s14 = int_to_ptr.vmem [resolvable:$true] %s13
      %19 = dma.hbm_to_vmem [thread:$0]  %s0, 2048, %s14, [#allocation3], 128, 128, 8
    $region5: #{tpu_custom_call.1} parent=1 // pred_fallthru
      _
    // Predicated region
    $region6: #{tpu_custom_call.1} parent=1 // pred_check
      _
    $region7: #{tpu_custom_call.1} parent=1 // pred_check_branch
      %21 = sbr.rel (0) target = $region9
    $region8: #{tpu_custom_call.1} parent=1 // pred_region
      %22 = dma.done [#allocation3], 2048
    $region9: #{tpu_custom_call.1} parent=1 // pred_fallthru
      _
    %v23 = vld [vmem:[#allocation2] sm:$0xff]
    %v24 = vld [vmem:[#allocation2 + $0x8] sm:$0xff]
    %v25 = vadd.f32 %v23, 0.0
    %v26 = vadd.f32 %v24, 0.0
    %v27 = vsub.f32 %v25, 1.0
    %v28 = vsub.f32 %v26, 1.0
    %vm29 = vcmp.ge.f32.partialorder %v27, 0.0
    %vm30 = vcmp.ge.f32.partialorder %v28, 0.0
    %v31 = vsel %vm29, 1, 0
    %v32 = vsel %vm30, 1, 0
    %v33 = vcvt.s32.f32 %v31
    %v34 = vcvt.s32.f32 %v32
    %v35 = vpack.c.bf16 %v34, %v33
    %v37 = vunpack.c.l.b16 %v35
    %v38 = vunpack.c.h.b16 %v35
    %v39 = vpack.c.b16 %v37, %v37
    %v40 = vpack.c.b16 %v38, %v38
    %43 = vst [vmem:[#allocation5] sm:$0xf] %v39
    %44 = vst [vmem:[#allocation5 + $0x4] sm:$0xf] %v40
    %v45 = vsel %vm29, 0.0, %v25
    %v46 = vsel %vm30, 0.0, %v26
    %v47 = vmul.f32 %v45, 0.99
    %v48 = vmul.f32 %v46, 0.99
    %s49 = scalar_lea.vmem [#allocation2], 16
    %v50 = vld [vmem:[%s49] sm:$0xff]
    %v51 = vld [vmem:[%s49 + $0x8] sm:$0xff]
    %v52 = vadd.f32 %v47, %v50
    %v53 = vadd.f32 %v48, %v51
    %v54 = vsub.f32 %v52, 1.0
    %v55 = vsub.f32 %v53, 1.0
    %vm56 = vcmp.ge.f32.partialorder %v54, 0.0
    %vm57 = vcmp.ge.f32.partialorder %v55, 0.0
    %v58 = vsel %vm56, 1, 0
    %v59 = vsel %vm57, 1, 0
    %v60 = vcvt.s32.f32 %v58
    %v61 = vcvt.s32.f32 %v59
    %v62 = vpack.c.bf16 %v61, %v60
    %v64 = vunpack.c.l.b16 %v62
    %v65 = vunpack.c.h.b16 %v62
    %v66 = vpack.c.b16 %v64, %v64
    %v67 = vpack.c.b16 %v65, %v65
    %s70 = scalar_lea.vmem [#allocation5], 8
    %71 = vst [vmem:[%s70] sm:$0xf] %v66
    %72 = vst [vmem:[%s70 + $0x4] sm:$0xf] %v67
    %v73 = vsel %vm56, 0.0, %v52
    %v74 = vsel %vm57, 0.0, %v53
    %v75 = vmul.f32 %v73, 0.99
    %v76 = vmul.f32 %v74, 0.99
    %s77 = scalar_lea.vmem [#allocation2], 32
    %v78 = vld [vmem:[%s77] sm:$0xff]
    %v79 = vld [vmem:[%s77 + $0x8] sm:$0xff]
    %v80 = vadd.f32 %v75, %v78
    %v81 = vadd.f32 %v76, %v79
    %v82 = vsub.f32 %v80, 1.0
    %v83 = vsub.f32 %v81, 1.0
    %vm84 = vcmp.ge.f32.partialorder %v82, 0.0
    %vm85 = vcmp.ge.f32.partialorder %v83, 0.0
    %v86 = vsel %vm84, 1, 0
    %v87 = vsel %vm85, 1, 0
    %v88 = vcvt.s32.f32 %v86
    %v89 = vcvt.s32.f32 %v87
    %v90 = vpack.c.bf16 %v89, %v88
    %v92 = vunpack.c.l.b16 %v90
    %v93 = vunpack.c.h.b16 %v90
    %v94 = vpack.c.b16 %v92, %v92
    %v95 = vpack.c.b16 %v93, %v93
    %s98 = scalar_lea.vmem [#allocation5], 16
    %99 = vst [vmem:[%s98] sm:$0xf] %v94
    %100 = vst [vmem:[%s98 + $0x4] sm:$0xf] %v95
    %v101 = vsel %vm84, 0.0, %v80
    %v102 = vsel %vm85, 0.0, %v81
    %v103 = vmul.f32 %v101, 0.99
    %v104 = vmul.f32 %v102, 0.99
    %s105 = scalar_lea.vmem [#allocation2], 48
    %v106 = vld [vmem:[%s105] sm:$0xff]
    %v107 = vld [vmem:[%s105 + $0x8] sm:$0xff]
    %v108 = vadd.f32 %v103, %v106
    %v109 = vadd.f32 %v104, %v107
    %v110 = vsub.f32 %v108, 1.0
    %v111 = vsub.f32 %v109, 1.0
    %vm112 = vcmp.ge.f32.partialorder %v110, 0.0
    %vm113 = vcmp.ge.f32.partialorder %v111, 0.0
    %v114 = vsel %vm112, 1, 0
    %v115 = vsel %vm113, 1, 0
    %v116 = vcvt.s32.f32 %v114
    %v117 = vcvt.s32.f32 %v115
    %v118 = vpack.c.bf16 %v117, %v116
    %v120 = vunpack.c.l.b16 %v118
    %v121 = vunpack.c.h.b16 %v118
    %v122 = vpack.c.b16 %v120, %v120
    %v123 = vpack.c.b16 %v121, %v121
    %s126 = scalar_lea.vmem [#allocation5], 24
    %127 = vst [vmem:[%s126] sm:$0xf] %v122
    %128 = vst [vmem:[%s126 + $0x4] sm:$0xf] %v123
    %v129 = vsel %vm112, 0.0, %v108
    %v130 = vsel %vm113, 0.0, %v109
    %v131 = vmul.f32 %v129, 0.99
    %v132 = vmul.f32 %v130, 0.99
    %s133 = scalar_lea.vmem [#allocation2], 64
    %v134 = vld [vmem:[%s133] sm:$0xff]
    %v135 = vld [vmem:[%s133 + $0x8] sm:$0xff]
    %v136 = vadd.f32 %v131, %v134
    %v137 = vadd.f32 %v132, %v135
    %v138 = vsub.f32 %v136, 1.0
    %v139 = vsub.f32 %v137, 1.0
    %vm140 = vcmp.ge.f32.partialorder %v138, 0.0
    %vm141 = vcmp.ge.f32.partialorder %v139, 0.0
    %v142 = vsel %vm140, 1, 0
    %v143 = vsel %vm141, 1, 0
    %v144 = vcvt.s32.f32 %v142
    %v145 = vcvt.s32.f32 %v143
    %v146 = vpack.c.bf16 %v145, %v144
    %v148 = vunpack.c.l.b16 %v146
    %v149 = vunpack.c.h.b16 %v146
    %v150 = vpack.c.b16 %v148, %v148
    %v151 = vpack.c.b16 %v149, %v149
    %s154 = scalar_lea.vmem [#allocation5], 32
    %155 = vst [vmem:[%s154] sm:$0xf] %v150
    %156 = vst [vmem:[%s154 + $0x4] sm:$0xf] %v151
    %v157 = vsel %vm140, 0.0, %v136
    %v158 = vsel %vm141, 0.0, %v137
    %v159 = vmul.f32 %v157, 0.99
    %v160 = vmul.f32 %v158, 0.99
    %s161 = scalar_lea.vmem [#allocation2], 80
    %v162 = vld [vmem:[%s161] sm:$0xff]
    %v163 = vld [vmem:[%s161 + $0x8] sm:$0xff]
    %v164 = vadd.f32 %v159, %v162
    %v165 = vadd.f32 %v160, %v163
    %v166 = vsub.f32 %v164, 1.0
    %v167 = vsub.f32 %v165, 1.0
    %vm168 = vcmp.ge.f32.partialorder %v166, 0.0
    %vm169 = vcmp.ge.f32.partialorder %v167, 0.0
    %v170 = vsel %vm168, 1, 0
    %v171 = vsel %vm169, 1, 0
    %v172 = vcvt.s32.f32 %v170
    %v173 = vcvt.s32.f32 %v171
    %v174 = vpack.c.bf16 %v173, %v172
    %v176 = vunpack.c.l.b16 %v174
    %v177 = vunpack.c.h.b16 %v174
    %v178 = vpack.c.b16 %v176, %v176
    %v179 = vpack.c.b16 %v177, %v177
    %s182 = scalar_lea.vmem [#allocation5], 40
    %183 = vst [vmem:[%s182] sm:$0xf] %v178
    %184 = vst [vmem:[%s182 + $0x4] sm:$0xf] %v179
    %v185 = vsel %vm168, 0.0, %v164
    %v186 = vsel %vm169, 0.0, %v165
    %v187 = vmul.f32 %v185, 0.99
    %v188 = vmul.f32 %v186, 0.99
    %s189 = scalar_lea.vmem [#allocation2], 96
    %v190 = vld [vmem:[%s189] sm:$0xff]
    %v191 = vld [vmem:[%s189 + $0x8] sm:$0xff]
    %v192 = vadd.f32 %v187, %v190
    %v193 = vadd.f32 %v188, %v191
    %v194 = vsub.f32 %v192, 1.0
    %v195 = vsub.f32 %v193, 1.0
    %vm196 = vcmp.ge.f32.partialorder %v194, 0.0
    %vm197 = vcmp.ge.f32.partialorder %v195, 0.0
    %v198 = vsel %vm196, 1, 0
    %v199 = vsel %vm197, 1, 0
    %v200 = vcvt.s32.f32 %v198
    %v201 = vcvt.s32.f32 %v199
    %v202 = vpack.c.bf16 %v201, %v200
    %v204 = vunpack.c.l.b16 %v202
    %v205 = vunpack.c.h.b16 %v202
    %v206 = vpack.c.b16 %v204, %v204
    %v207 = vpack.c.b16 %v205, %v205
    %s210 = scalar_lea.vmem [#allocation5], 48
    %211 = vst [vmem:[%s210] sm:$0xf] %v206
    %212 = vst [vmem:[%s210 + $0x4] sm:$0xf] %v207
    %v213 = vsel %vm196, 0.0, %v192
    %v214 = vsel %vm197, 0.0, %v193
    %v215 = vmul.f32 %v213, 0.99
    %v216 = vmul.f32 %v214, 0.99
    %s217 = scalar_lea.vmem [#allocation2], 112
    %v218 = vld [vmem:[%s217] sm:$0xff]
    %v219 = vld [vmem:[%s217 + $0x8] sm:$0xff]
    %v220 = vadd.f32 %v215, %v218
    %v221 = vadd.f32 %v216, %v219
    %v222 = vsub.f32 %v220, 1.0
    %v223 = vsub.f32 %v221, 1.0
    %vm224 = vcmp.ge.f32.partialorder %v222, 0.0
    %vm225 = vcmp.ge.f32.partialorder %v223, 0.0
    %v226 = vsel %vm224, 1, 0
    %v227 = vsel %vm225, 1, 0
    %v228 = vcvt.s32.f32 %v226
    %v229 = vcvt.s32.f32 %v227
    %v230 = vpack.c.bf16 %v229, %v228
    %v232 = vunpack.c.l.b16 %v230
    %v233 = vunpack.c.h.b16 %v230
    %v234 = vpack.c.b16 %v232, %v232
    %v235 = vpack.c.b16 %v233, %v233
    %s238 = scalar_lea.vmem [#allocation5], 56
    %239 = vst [vmem:[%s238] sm:$0xf] %v234
    %240 = vst [vmem:[%s238 + $0x4] sm:$0xf] %v235
    // Predicated region
    $region10: #{tpu_custom_call.1} parent=1 // pred_check
      _
    $region11: #{tpu_custom_call.1} parent=1 // pred_check_branch
      %242 = sbr.rel (0) target = $region13
    $region12: #{tpu_custom_call.1} parent=1 // pred_region
      %s244 = ssub.s32 1024, 1024
      %245 = vsyncadd [#allocation4], %s244
      %s246 = sshll.u32 [#allocation5], 4
      %s247 = int_to_ptr.vmem [resolvable:$true] %s246
      %252 = dma.vmem_to_hbm [thread:$0]  %s247, 1024, %s1, [#allocation4], 64, 64, 4
    $region13: #{tpu_custom_call.1} parent=1 // pred_fallthru
      _
    // Predicated region
    $region14: #{tpu_custom_call.1} parent=1 // pred_check
      _
    $region15: #{tpu_custom_call.1} parent=1 // pred_check_branch
      %254 = sbr.rel (0) target = $region17
    $region16: #{tpu_custom_call.1} parent=1 // pred_region
      %255 = dma.done [#allocation4], 1024
    $region17: #{tpu_custom_call.1} parent=1 // pred_fallthru
      _
    %256 = vsyncpa [#allocation3], 1
    %257 = vsyncpa [#allocation4], 1

</llo_original>
